<compile_context>
chip_gen: v7x
topology: tpu7x:2x2x1
jax: 0.10.0
libtpu: 0.0.40
codegen_flags: <defaults>
</compile_context>

<pallas_src>
import functools

import numpy as np
import jax
import jax.numpy as jnp
from jax import lax
from jax.experimental import pallas as pl
from jax.experimental.pallas import tpu as pltpu

LANES = 128
MAX_TOTAL_BLOCK_ROWS = 1024   # rows (x128 lanes) of one input block, whole batch
MAX_STRIP_ROWS = 64           # rows per in-kernel strip (bounds vreg live ranges)
NUM_SHARDS = 2                # leading "parallel" grid axis (v7x: one per TC)


def _plan(n_cells_per_item, batch_size):
    """Static tiling plan, shared by the host target builder and the jit trace."""
    rows0 = -(-n_cells_per_item // LANES)            # ceil(N / 128)
    rows0 = max(8, -(-rows0 // 8) * 8)               # multiple of 8 sublanes
    # Per-batch-item rows per block, bounded so the whole-batch block stays in
    # budget (2 inputs x 2 pipeline buffers x B*5*tr*128*4B ~= 10 MiB at 1024).
    budget = max(8, (MAX_TOTAL_BLOCK_ROWS // batch_size) // 8 * 8)
    tr = min(rows0, budget)
    strip = next(s for s in (MAX_STRIP_ROWS, 32, 16, 8) if tr % s == 0)
    chunk = tr * NUM_SHARDS
    r_pad = -(-rows0 // chunk) * chunk               # padded rows per batch item
    nb = r_pad // chunk                              # row-blocks per shard
    return r_pad, tr, strip, NUM_SHARDS, nb


def _make_loss_kernel(batch_size, tr, strip):
    """Fused masked-MSE partial-sum kernel over a (B, 5, tr, 128) block."""
    strips_per_item = tr // strip
    total_strips = batch_size * strips_per_item
    fold = strip // 8

    def kernel(pred_ref, tgt_ref, out_ref):
        # out_ref is this shard's resident (1, 3, 8, 128) accumulator block:
        #   [0] = sum (p_obj - t_obj)^2 over ALL cells
        #   [1] = same, masked to object cells
        #   [2] = object-masked bbox squared error.
        @pl.when(pl.program_id(1) == 0)
        def _init():
            out_ref[...] = jnp.zeros_like(out_ref)

        def fold_to_vreg(v):             # (strip,128) -> (8,128), plain VPU adds
            return jnp.sum(v.reshape(fold, 8, LANES), axis=0)

        def strip_body(k, carry):
            if strips_per_item == 1:
                b, r = k, 0
            else:
                b = k // strips_per_item
                r = pl.multiple_of((k % strips_per_item) * strip, strip)

            t_obj = tgt_ref[b, 0, pl.ds(r, strip), :]
            p_obj = pred_ref[b, 0, pl.ds(r, strip), :]
            obj_mask = (t_obj > 0.5).astype(jnp.float32)
            d2 = (p_obj - t_obj) ** 2          # padded cells: both 0 -> 0
            out_ref[0, 0] += fold_to_vreg(d2)
            out_ref[0, 1] += fold_to_vreg(obj_mask * d2)

            # bbox term, one channel pair at a time (keeps live vregs small).
            px = pred_ref[b, 1, pl.ds(r, strip), :]
            tx = tgt_ref[b, 1, pl.ds(r, strip), :]
            bbox = (jax.nn.sigmoid(px) - tx) ** 2      # sigmoid -> EUP slot
            py = pred_ref[b, 2, pl.ds(r, strip), :]
            ty = tgt_ref[b, 2, pl.ds(r, strip), :]
            bbox = bbox + (jax.nn.sigmoid(py) - ty) ** 2
            pw = pred_ref[b, 3, pl.ds(r, strip), :]
            tw = tgt_ref[b, 3, pl.ds(r, strip), :]
            bbox = bbox + (pw - tw) ** 2
            ph = pred_ref[b, 4, pl.ds(r, strip), :]
            th = tgt_ref[b, 4, pl.ds(r, strip), :]
            bbox = bbox + (ph - th) ** 2
            out_ref[0, 2] += fold_to_vreg(obj_mask * bbox)
            return carry

        if total_strips <= 4:
            unroll = True
        elif total_strips % 2 == 0:
            unroll = 2
        else:
            unroll = 1
        lax.fori_loop(0, total_strips, strip_body, 0, unroll=unroll)

    return kernel


def _pallas_loss_sums(pred_slab, tgt_slab, tr, strip, ns, nb):
    """One fused pallas_call over all scales / batch.  Returns (ns,3,8,128)."""
    B, C, r_pad, lanes = pred_slab.shape
    assert C == 5 and lanes == LANES and r_pad == tr * ns * nb
    in_blk = pl.BlockSpec((B, 5, tr, LANES), lambda s, i: (0, 0, s * nb + i, 0))
    out_blk = pl.BlockSpec((1, 3, 8, LANES), lambda s, i: (s, 0, 0, 0))
    return pl.pallas_call(
        _make_loss_kernel(B, tr, strip),
        out_shape=jax.ShapeDtypeStruct((ns, 3, 8, LANES), jnp.float32),
        grid_spec=pltpu.PrefetchScalarGridSpec(
            num_scalar_prefetch=0,
            grid=(ns, nb),
            in_specs=[in_blk, in_blk],
            out_specs=out_blk,
        ),
        compiler_params=pltpu.CompilerParams(
            dimension_semantics=("parallel", "arbitrary"),
            vmem_limit_bytes=32 * 1024 * 1024,
        ),
        # TODO(synk): if DMA is still exposed on v6e at real sizes, add
        # pipeline_mode=pl.Buffered(3) on the two input BlockSpecs.
    )(pred_slab, tgt_slab)


@functools.partial(jax.jit, static_argnames=("lambdas",))
def _bibnet_loss_device(predictions, tgt_slab, lambdas):
    """On-device: native-layout slab build, fused kernel, tiny final reduce."""
    B = tgt_slab.shape[0]
    n_cells = sum(int(p.shape[-2]) * int(p.shape[-1]) for p in predictions)
    r_pad, tr, strip, ns, nb = _plan(n_cells, B)
    assert tgt_slab.shape == (B, 5, r_pad, LANES), (tgt_slab.shape, r_pad)

    # Native NCHW layout: channel slice + spatial flatten (free), concat along
    # the cell axis only, zero-pad the tail, reshape to (B,5,R,128).
    pred_cat = jnp.concatenate(
        [p[:, :5].astype(jnp.float32).reshape(B, 5, -1) for p in predictions],
        axis=2)
    pred_slab = jnp.pad(
        pred_cat, ((0, 0), (0, 0), (0, r_pad * LANES - n_cells)),
    ).reshape(B, 5, r_pad, LANES)

    partials = _pallas_loss_sums(pred_slab, tgt_slab.astype(jnp.float32),
                                 tr, strip, ns, nb)          # (ns, 3, 8, 128)
    sums = jnp.sum(partials, axis=(0, 2, 3))                 # tiny XLA reduce

    lam_obj, lam_noobj, lam_coord = lambdas
    inv_b = jnp.float32(1.0 / B)
    obj = lam_obj * sums[1] * inv_b
    # noobj = total - obj is exact, but can lose precision by cancellation if
    # object cells dominate the grid; fine for sparse detection targets.
    noobj = lam_noobj * (sums[0] - sums[1]) * inv_b
    bbox = lam_coord * sums[2] * inv_b
    total = obj + noobj + bbox
    return total, {"obj_loss": obj, "noobj_loss": noobj, "bbox_loss": bbox}


def build_target_slab(targets, batch_size, grid_sizes, strides, img_size, r_pad):
    """Host glue: scatter GT boxes straight into the padded channel-major
    (B, 5, R, 128) slab the kernel consumes (later boxes overwrite, matching
    the PyTorch per-box loop)."""
    # TODO(synk): if this runs every training step at large sizes, build the
    # target slab on device with a scatter from a padded box tensor instead.
    n_pad = r_pad * LANES
    tgt = np.zeros((batch_size, 5, n_pad), np.float32)
    offset = 0
    for g, s in zip(grid_sizes, strides):
        for b in range(batch_size):
            boxes = np.asarray(targets[b]["boxes"], np.float32).reshape(-1, 4)
            for cx, cy, w, h in boxes:
                cxg = cx * img_size / s
                cyg = cy * img_size / s
                gi, gj = int(cxg), int(cyg)          # .long() truncation
                if not (0 <= gi < g and 0 <= gj < g):
                    continue
                idx = offset + gj * g + gi           # NCHW spatial flatten order
                tgt[b, 0, idx] = 1.0
                tgt[b, 1, idx] = cxg - float(gi)
                tgt[b, 2, idx] = cyg - float(gj)
                tgt[b, 3, idx] = np.log(w * img_size / s + 1e-16)
                tgt[b, 4, idx] = np.log(h * img_size / s + 1e-16)
        offset += g * g
    return tgt.reshape(batch_size, 5, r_pad, LANES)


def bibnet_loss(predictions, targets, img_size, grid_sizes,
                lambda_obj=2.0, lambda_noobj=1.0, lambda_coord=5.0):
    """Forward pass of BibNetLoss.  Returns (total_loss, components) as jnp scalars."""
    strides = [img_size // g for g in grid_sizes]
    batch_size = len(targets)
    n_cells = sum(g * g for g in grid_sizes)
    r_pad, _, _, _, _ = _plan(n_cells, batch_size)

    tgt_slab = build_target_slab(targets, batch_size, grid_sizes, strides,
                                 img_size, r_pad)

    return _bibnet_loss_device(
        tuple(predictions), jnp.asarray(tgt_slab),
        (float(lambda_obj), float(lambda_noobj), float(lambda_coord)))


# ----------------------------- test-only reference -----------------------------

def _build_target_grid_np(targets, batch_size, grid_size, img_size, stride):
    tgt = np.zeros((batch_size, grid_size, grid_size, 5), np.float64)
    for b in range(batch_size):
        boxes = np.asarray(targets[b]["boxes"], np.float64).reshape(-1, 4)
        for cx, cy, w, h in boxes:
            cxg = cx * img_size / stride
            cyg = cy * img_size / stride
            gi, gj = int(cxg), int(cyg)
            if not (0 <= gi < grid_size and 0 <= gj < grid_size):
                continue
            tgt[b, gj, gi, 0] = 1.0
            tgt[b, gj, gi, 1] = cxg - float(gi)
            tgt[b, gj, gi, 2] = cyg - float(gj)
            tgt[b, gj, gi, 3] = np.log(w * img_size / stride + 1e-16)
            tgt[b, gj, gi, 4] = np.log(h * img_size / stride + 1e-16)
    return tgt


def _reference_loss(predictions, targets, img_size, grid_sizes,
                    lambda_obj=2.0, lambda_noobj=1.0, lambda_coord=5.0):
    """Pure-numpy reference of the PyTorch forward (test-only)."""
    strides = [img_size // g for g in grid_sizes]
    batch_size = len(targets)
    sig = lambda z: 1.0 / (1.0 + np.exp(-z))
    total = 0.0
    comps = {"obj_loss": 0.0, "noobj_loss": 0.0, "bbox_loss": 0.0}
    for pred, g, s in zip(predictions, grid_sizes, strides):
        p = np.transpose(np.asarray(pred, np.float64), (0, 2, 3, 1))
        tgt = _build_target_grid_np(targets, batch_size, g, img_size, s)
        obj_mask = tgt[..., 0] > 0.5
        noobj_mask = ~obj_mask
        d2 = (p[..., 0] - tgt[..., 0]) ** 2
        obj_l = np.sum(d2[obj_mask])
        noobj_l = np.sum(d2[noobj_mask])
        if obj_mask.sum() > 0:
            bbox_l = (np.sum((sig(p[..., 1][obj_mask]) - tgt[..., 1][obj_mask]) ** 2)
                      + np.sum((sig(p[..., 2][obj_mask]) - tgt[..., 2][obj_mask]) ** 2)
                      + np.sum((p[..., 3][obj_mask] - tgt[..., 3][obj_mask]) ** 2)
                      + np.sum((p[..., 4][obj_mask] - tgt[..., 4][obj_mask]) ** 2))
        else:
            bbox_l = 0.0
        obj_l *= lambda_obj
        noobj_l *= lambda_noobj
        bbox_l *= lambda_coord
        comps["obj_loss"] += obj_l
        comps["noobj_loss"] += noobj_l
        comps["bbox_loss"] += bbox_l
        total += obj_l + noobj_l + bbox_l
    total /= batch_size
    for k in comps:
        comps[k] /= batch_size
    return total, comps


if __name__ == "__main__":
    img_size = 64
    grid_sizes = [8, 16]          # small scales consistent with the module
    B, C = 2, 6                   # C >= 5 (obj, x, y, w, h, extra)

    key = jax.random.PRNGKey(0)
    predictions = []
    for g in grid_sizes:
        key, sk = jax.random.split(key)
        predictions.append(jax.random.normal(sk, (B, C, g, g), jnp.float32))

    targets = [
        {"boxes": np.array([[0.30, 0.40, 0.20, 0.30],
                            [0.70, 0.20, 0.10, 0.10]], np.float32)},
        {"boxes": np.array([[0.55, 0.55, 0.40, 0.40]], np.float32)},
    ]

    total, comps = bibnet_loss(predictions, targets, img_size, grid_sizes)
    total = jax.block_until_ready(total)
    comps = jax.block_until_ready(comps)

    # One-off sanity check against the PyTorch math (outside the hot path).
    ref_total, ref_comps = _reference_loss(
        [np.asarray(p) for p in predictions], targets, img_size, grid_sizes)
    assert np.allclose(float(total), ref_total, rtol=1e-3, atol=1e-3), \
        (float(total), ref_total)
    for k in comps:
        assert np.allclose(float(comps[k]), ref_comps[k], rtol=1e-3, atol=1e-3), \
            (k, float(comps[k]), ref_comps[k])

    print("KERNEL_OK")
</pallas_src>

<mosaic_0001>
module attributes {stable_mosaic.version = 11 : i64} {
  func.func @kernel(%arg0: i32, %arg1: i32, %arg2: memref<2x5x8x128xf32, #tpu.memory_space<vmem>>, %arg3: memref<2x5x8x128xf32, #tpu.memory_space<vmem>>, %arg4: memref<1x3x8x128xf32, #tpu.memory_space<vmem>>) attributes {dimension_semantics = [#tpu.dimension_semantics<parallel>, #tpu.dimension_semantics<arbitrary>], iteration_bounds = array<i64: 2, 1>, scalar_prefetch = 0 : i64, scratch_operands = 0 : i64, tpu.core_type = #tpu.core_type<tc>, window_params = [{transform_indices = @transform_0, window_bounds = array<i64: 2, 5, 8, 128>}, {transform_indices = @transform_1, window_bounds = array<i64: 2, 5, 8, 128>}, {transform_indices = @transform_2, window_bounds = array<i64: 1, 3, 8, 128>}]} {
    %c0_i32 = arith.constant 0 : i32
    %0 = arith.cmpi eq, %arg1, %c0_i32 : i32
    %1 = arith.extui %0 : i1 to i32
    %c0_i32_0 = arith.constant 0 : i32
    %2 = arith.cmpi ne, %1, %c0_i32_0 : i32
    scf.if %2 {
      %cst_116 = arith.constant 0.000000e+00 : f32
      %169 = vector.broadcast %cst_116 : f32 to vector<1x3x8x128xf32>
      %c0_117 = arith.constant 0 : index
      %c0_118 = arith.constant 0 : index
      %c0_119 = arith.constant 0 : index
      %c0_120 = arith.constant 0 : index
      %170 = vector.load %arg4[%c0_117, %c0_118, %c0_119, %c0_120] : memref<1x3x8x128xf32, #tpu.memory_space<vmem>>, vector<1x3x8x128xf32>
      tpu.vector_store %arg4[%c0_117, %c0_118, %c0_119, %c0_120], %169 {strides = array<i32>} : memref<1x3x8x128xf32, #tpu.memory_space<vmem>>, vector<1x3x8x128xf32>,
    } else {
    }
    %c0_i32_1 = arith.constant 0 : i32
    %3 = arith.index_cast %c0_i32_1 : i32 to index
    %c0 = arith.constant 0 : index
    %c0_2 = arith.constant 0 : index
    %c0_3 = arith.constant 0 : index
    %4 = vector.load %arg3[%3, %c0, %c0_2, %c0_3] : memref<2x5x8x128xf32, #tpu.memory_space<vmem>>, vector<1x1x8x128xf32>
    %5 = vector.shape_cast %4 : vector<1x1x8x128xf32> to vector<8x128xf32>
    %6 = arith.index_cast %c0_i32_1 : i32 to index
    %c0_4 = arith.constant 0 : index
    %c0_5 = arith.constant 0 : index
    %c0_6 = arith.constant 0 : index
    %7 = vector.load %arg2[%6, %c0_4, %c0_5, %c0_6] : memref<2x5x8x128xf32, #tpu.memory_space<vmem>>, vector<1x1x8x128xf32>
    %8 = vector.shape_cast %7 : vector<1x1x8x128xf32> to vector<8x128xf32>
    %cst = arith.constant 5.000000e-01 : f32
    %9 = vector.broadcast %cst : f32 to vector<8x128xf32>
    %10 = arith.cmpf ogt, %5, %9 : vector<8x128xf32>
    %11 = arith.extui %10 : vector<8x128xi1> to vector<8x128xi32>
    %12 = arith.sitofp %11 : vector<8x128xi32> to vector<8x128xf32>
    %13 = arith.subf %8, %5 : vector<8x128xf32>
    %14 = arith.mulf %13, %13 : vector<8x128xf32>
    %c0_7 = arith.constant 0 : index
    %c0_8 = arith.constant 0 : index
    %c0_9 = arith.constant 0 : index
    %c0_10 = arith.constant 0 : index
    %15 = vector.load %arg4[%c0_7, %c0_8, %c0_9, %c0_10] : memref<1x3x8x128xf32, #tpu.memory_space<vmem>>, vector<1x1x8x128xf32>
    %16 = vector.shape_cast %15 : vector<1x1x8x128xf32> to vector<8x128xf32>
    %17 = vector.shape_cast %14 : vector<8x128xf32> to vector<1x8x128xf32>
    %cst_11 = arith.constant dense<0.000000e+00> : vector<8x128xf32>
    %18 = vector.multi_reduction <add>, %17, %cst_11 [0] : vector<1x8x128xf32> to vector<8x128xf32>
    %19 = arith.addf %16, %18 : vector<8x128xf32>
    %c0_12 = arith.constant 0 : index
    %c0_13 = arith.constant 0 : index
    %c0_14 = arith.constant 0 : index
    %c0_15 = arith.constant 0 : index
    %20 = vector.load %arg4[%c0_12, %c0_13, %c0_14, %c0_15] : memref<1x3x8x128xf32, #tpu.memory_space<vmem>>, vector<1x1x8x128xf32>
    %21 = vector.shape_cast %20 : vector<1x1x8x128xf32> to vector<8x128xf32>
    %22 = vector.shape_cast %19 : vector<8x128xf32> to vector<1x1x8x128xf32>
    tpu.vector_store %arg4[%c0_12, %c0_13, %c0_14, %c0_15], %22 {strides = array<i32>} : memref<1x3x8x128xf32, #tpu.memory_space<vmem>>, vector<1x1x8x128xf32>,
    %c0_16 = arith.constant 0 : index
    %c1 = arith.constant 1 : index
    %c0_17 = arith.constant 0 : index
    %c0_18 = arith.constant 0 : index
    %23 = vector.load %arg4[%c0_16, %c1, %c0_17, %c0_18] : memref<1x3x8x128xf32, #tpu.memory_space<vmem>>, vector<1x1x8x128xf32>
    %24 = vector.shape_cast %23 : vector<1x1x8x128xf32> to vector<8x128xf32>
    %25 = arith.mulf %12, %14 : vector<8x128xf32>
    %26 = vector.shape_cast %25 : vector<8x128xf32> to vector<1x8x128xf32>
    %cst_19 = arith.constant dense<0.000000e+00> : vector<8x128xf32>
    %27 = vector.multi_reduction <add>, %26, %cst_19 [0] : vector<1x8x128xf32> to vector<8x128xf32>
    %28 = arith.addf %24, %27 : vector<8x128xf32>
    %c0_20 = arith.constant 0 : index
    %c1_21 = arith.constant 1 : index
    %c0_22 = arith.constant 0 : index
    %c0_23 = arith.constant 0 : index
    %29 = vector.load %arg4[%c0_20, %c1_21, %c0_22, %c0_23] : memref<1x3x8x128xf32, #tpu.memory_space<vmem>>, vector<1x1x8x128xf32>
    %30 = vector.shape_cast %29 : vector<1x1x8x128xf32> to vector<8x128xf32>
    %31 = vector.shape_cast %28 : vector<8x128xf32> to vector<1x1x8x128xf32>
    tpu.vector_store %arg4[%c0_20, %c1_21, %c0_22, %c0_23], %31 {strides = array<i32>} : memref<1x3x8x128xf32, #tpu.memory_space<vmem>>, vector<1x1x8x128xf32>,
    %32 = arith.index_cast %c0_i32_1 : i32 to index
    %c1_24 = arith.constant 1 : index
    %c0_25 = arith.constant 0 : index
    %c0_26 = arith.constant 0 : index
    %33 = vector.load %arg2[%32, %c1_24, %c0_25, %c0_26] : memref<2x5x8x128xf32, #tpu.memory_space<vmem>>, vector<1x1x8x128xf32>
    %34 = vector.shape_cast %33 : vector<1x1x8x128xf32> to vector<8x128xf32>
    %35 = arith.index_cast %c0_i32_1 : i32 to index
    %c1_27 = arith.constant 1 : index
    %c0_28 = arith.constant 0 : index
    %c0_29 = arith.constant 0 : index
    %36 = vector.load %arg3[%35, %c1_27, %c0_28, %c0_29] : memref<2x5x8x128xf32, #tpu.memory_space<vmem>>, vector<1x1x8x128xf32>
    %37 = vector.shape_cast %36 : vector<1x1x8x128xf32> to vector<8x128xf32>
    %38 = arith.negf %34 : vector<8x128xf32>
    %39 = math.exp %38 : vector<8x128xf32>
    %cst_30 = arith.constant 1.000000e+00 : f32
    %40 = vector.broadcast %cst_30 : f32 to vector<8x128xf32>
    %41 = arith.addf %40, %39 : vector<8x128xf32>
    %42 = arith.divf %40, %41 : vector<8x128xf32>
    %43 = arith.subf %42, %37 : vector<8x128xf32>
    %44 = arith.mulf %43, %43 : vector<8x128xf32>
    %45 = arith.index_cast %c0_i32_1 : i32 to index
    %c2 = arith.constant 2 : index
    %c0_31 = arith.constant 0 : index
    %c0_32 = arith.constant 0 : index
    %46 = vector.load %arg2[%45, %c2, %c0_31, %c0_32] : memref<2x5x8x128xf32, #tpu.memory_space<vmem>>, vector<1x1x8x128xf32>
    %47 = vector.shape_cast %46 : vector<1x1x8x128xf32> to vector<8x128xf32>
    %48 = arith.index_cast %c0_i32_1 : i32 to index
    %c2_33 = arith.constant 2 : index
    %c0_34 = arith.constant 0 : index
    %c0_35 = arith.constant 0 : index
    %49 = vector.load %arg3[%48, %c2_33, %c0_34, %c0_35] : memref<2x5x8x128xf32, #tpu.memory_space<vmem>>, vector<1x1x8x128xf32>
    %50 = vector.shape_cast %49 : vector<1x1x8x128xf32> to vector<8x128xf32>
    %51 = arith.negf %47 : vector<8x128xf32>
    %52 = math.exp %51 : vector<8x128xf32>
    %cst_36 = arith.constant 1.000000e+00 : f32
    %53 = vector.broadcast %cst_36 : f32 to vector<8x128xf32>
    %54 = arith.addf %53, %52 : vector<8x128xf32>
    %55 = arith.divf %53, %54 : vector<8x128xf32>
    %56 = arith.subf %55, %50 : vector<8x128xf32>
    %57 = arith.mulf %56, %56 : vector<8x128xf32>
    %58 = arith.addf %44, %57 : vector<8x128xf32>
    %59 = arith.index_cast %c0_i32_1 : i32 to index
    %c3 = arith.constant 3 : index
    %c0_37 = arith.constant 0 : index
    %c0_38 = arith.constant 0 : index
    %60 = vector.load %arg2[%59, %c3, %c0_37, %c0_38] : memref<2x5x8x128xf32, #tpu.memory_space<vmem>>, vector<1x1x8x128xf32>
    %61 = vector.shape_cast %60 : vector<1x1x8x128xf32> to vector<8x128xf32>
    %62 = arith.index_cast %c0_i32_1 : i32 to index
    %c3_39 = arith.constant 3 : index
    %c0_40 = arith.constant 0 : index
    %c0_41 = arith.constant 0 : index
    %63 = vector.load %arg3[%62, %c3_39, %c0_40, %c0_41] : memref<2x5x8x128xf32, #tpu.memory_space<vmem>>, vector<1x1x8x128xf32>
    %64 = vector.shape_cast %63 : vector<1x1x8x128xf32> to vector<8x128xf32>
    %65 = arith.subf %61, %64 : vector<8x128xf32>
    %66 = arith.mulf %65, %65 : vector<8x128xf32>
    %67 = arith.addf %58, %66 : vector<8x128xf32>
    %68 = arith.index_cast %c0_i32_1 : i32 to index
    %c4 = arith.constant 4 : index
    %c0_42 = arith.constant 0 : index
    %c0_43 = arith.constant 0 : index
    %69 = vector.load %arg2[%68, %c4, %c0_42, %c0_43] : memref<2x5x8x128xf32, #tpu.memory_space<vmem>>, vector<1x1x8x128xf32>
    %70 = vector.shape_cast %69 : vector<1x1x8x128xf32> to vector<8x128xf32>
    %71 = arith.index_cast %c0_i32_1 : i32 to index
    %c4_44 = arith.constant 4 : index
    %c0_45 = arith.constant 0 : index
    %c0_46 = arith.constant 0 : index
    %72 = vector.load %arg3[%71, %c4_44, %c0_45, %c0_46] : memref<2x5x8x128xf32, #tpu.memory_space<vmem>>, vector<1x1x8x128xf32>
    %73 = vector.shape_cast %72 : vector<1x1x8x128xf32> to vector<8x128xf32>
    %74 = arith.subf %70, %73 : vector<8x128xf32>
    %75 = arith.mulf %74, %74 : vector<8x128xf32>
    %76 = arith.addf %67, %75 : vector<8x128xf32>
    %c0_47 = arith.constant 0 : index
    %c2_48 = arith.constant 2 : index
    %c0_49 = arith.constant 0 : index
    %c0_50 = arith.constant 0 : index
    %77 = vector.load %arg4[%c0_47, %c2_48, %c0_49, %c0_50] : memref<1x3x8x128xf32, #tpu.memory_space<vmem>>, vector<1x1x8x128xf32>
    %78 = vector.shape_cast %77 : vector<1x1x8x128xf32> to vector<8x128xf32>
    %79 = arith.mulf %12, %76 : vector<8x128xf32>
    %80 = vector.shape_cast %79 : vector<8x128xf32> to vector<1x8x128xf32>
    %cst_51 = arith.constant dense<0.000000e+00> : vector<8x128xf32>
    %81 = vector.multi_reduction <add>, %80, %cst_51 [0] : vector<1x8x128xf32> to vector<8x128xf32>
    %82 = arith.addf %78, %81 : vector<8x128xf32>
    %c0_52 = arith.constant 0 : index
    %c2_53 = arith.constant 2 : index
    %c0_54 = arith.constant 0 : index
    %c0_55 = arith.constant 0 : index
    %83 = vector.load %arg4[%c0_52, %c2_53, %c0_54, %c0_55] : memref<1x3x8x128xf32, #tpu.memory_space<vmem>>, vector<1x1x8x128xf32>
    %84 = vector.shape_cast %83 : vector<1x1x8x128xf32> to vector<8x128xf32>
    %85 = vector.shape_cast %82 : vector<8x128xf32> to vector<1x1x8x128xf32>
    tpu.vector_store %arg4[%c0_52, %c2_53, %c0_54, %c0_55], %85 {strides = array<i32>} : memref<1x3x8x128xf32, #tpu.memory_space<vmem>>, vector<1x1x8x128xf32>,
    %c1_i32 = arith.constant 1 : i32
    %86 = arith.index_cast %c1_i32 : i32 to index
    %c0_56 = arith.constant 0 : index
    %c0_57 = arith.constant 0 : index
    %c0_58 = arith.constant 0 : index
    %87 = vector.load %arg3[%86, %c0_56, %c0_57, %c0_58] : memref<2x5x8x128xf32, #tpu.memory_space<vmem>>, vector<1x1x8x128xf32>
    %88 = vector.shape_cast %87 : vector<1x1x8x128xf32> to vector<8x128xf32>
    %89 = arith.index_cast %c1_i32 : i32 to index
    %c0_59 = arith.constant 0 : index
    %c0_60 = arith.constant 0 : index
    %c0_61 = arith.constant 0 : index
    %90 = vector.load %arg2[%89, %c0_59, %c0_60, %c0_61] : memref<2x5x8x128xf32, #tpu.memory_space<vmem>>, vector<1x1x8x128xf32>
    %91 = vector.shape_cast %90 : vector<1x1x8x128xf32> to vector<8x128xf32>
    %cst_62 = arith.constant 5.000000e-01 : f32
    %92 = vector.broadcast %cst_62 : f32 to vector<8x128xf32>
    %93 = arith.cmpf ogt, %88, %92 : vector<8x128xf32>
    %94 = arith.extui %93 : vector<8x128xi1> to vector<8x128xi32>
    %95 = arith.sitofp %94 : vector<8x128xi32> to vector<8x128xf32>
    %96 = arith.subf %91, %88 : vector<8x128xf32>
    %97 = arith.mulf %96, %96 : vector<8x128xf32>
    %c0_63 = arith.constant 0 : index
    %c0_64 = arith.constant 0 : index
    %c0_65 = arith.constant 0 : index
    %c0_66 = arith.constant 0 : index
    %98 = vector.load %arg4[%c0_63, %c0_64, %c0_65, %c0_66] : memref<1x3x8x128xf32, #tpu.memory_space<vmem>>, vector<1x1x8x128xf32>
    %99 = vector.shape_cast %98 : vector<1x1x8x128xf32> to vector<8x128xf32>
    %100 = vector.shape_cast %97 : vector<8x128xf32> to vector<1x8x128xf32>
    %cst_67 = arith.constant dense<0.000000e+00> : vector<8x128xf32>
    %101 = vector.multi_reduction <add>, %100, %cst_67 [0] : vector<1x8x128xf32> to vector<8x128xf32>
    %102 = arith.addf %99, %101 : vector<8x128xf32>
    %c0_68 = arith.constant 0 : index
    %c0_69 = arith.constant 0 : index
    %c0_70 = arith.constant 0 : index
    %c0_71 = arith.constant 0 : index
    %103 = vector.load %arg4[%c0_68, %c0_69, %c0_70, %c0_71] : memref<1x3x8x128xf32, #tpu.memory_space<vmem>>, vector<1x1x8x128xf32>
    %104 = vector.shape_cast %103 : vector<1x1x8x128xf32> to vector<8x128xf32>
    %105 = vector.shape_cast %102 : vector<8x128xf32> to vector<1x1x8x128xf32>
    tpu.vector_store %arg4[%c0_68, %c0_69, %c0_70, %c0_71], %105 {strides = array<i32>} : memref<1x3x8x128xf32, #tpu.memory_space<vmem>>, vector<1x1x8x128xf32>,
    %c0_72 = arith.constant 0 : index
    %c1_73 = arith.constant 1 : index
    %c0_74 = arith.constant 0 : index
    %c0_75 = arith.constant 0 : index
    %106 = vector.load %arg4[%c0_72, %c1_73, %c0_74, %c0_75] : memref<1x3x8x128xf32, #tpu.memory_space<vmem>>, vector<1x1x8x128xf32>
    %107 = vector.shape_cast %106 : vector<1x1x8x128xf32> to vector<8x128xf32>
    %108 = arith.mulf %95, %97 : vector<8x128xf32>
    %109 = vector.shape_cast %108 : vector<8x128xf32> to vector<1x8x128xf32>
    %cst_76 = arith.constant dense<0.000000e+00> : vector<8x128xf32>
    %110 = vector.multi_reduction <add>, %109, %cst_76 [0] : vector<1x8x128xf32> to vector<8x128xf32>
    %111 = arith.addf %107, %110 : vector<8x128xf32>
    %c0_77 = arith.constant 0 : index
    %c1_78 = arith.constant 1 : index
    %c0_79 = arith.constant 0 : index
    %c0_80 = arith.constant 0 : index
    %112 = vector.load %arg4[%c0_77, %c1_78, %c0_79, %c0_80] : memref<1x3x8x128xf32, #tpu.memory_space<vmem>>, vector<1x1x8x128xf32>
    %113 = vector.shape_cast %112 : vector<1x1x8x128xf32> to vector<8x128xf32>
    %114 = vector.shape_cast %111 : vector<8x128xf32> to vector<1x1x8x128xf32>
    tpu.vector_store %arg4[%c0_77, %c1_78, %c0_79, %c0_80], %114 {strides = array<i32>} : memref<1x3x8x128xf32, #tpu.memory_space<vmem>>, vector<1x1x8x128xf32>,
    %115 = arith.index_cast %c1_i32 : i32 to index
    %c1_81 = arith.constant 1 : index
    %c0_82 = arith.constant 0 : index
    %c0_83 = arith.constant 0 : index
    %116 = vector.load %arg2[%115, %c1_81, %c0_82, %c0_83] : memref<2x5x8x128xf32, #tpu.memory_space<vmem>>, vector<1x1x8x128xf32>
    %117 = vector.shape_cast %116 : vector<1x1x8x128xf32> to vector<8x128xf32>
    %118 = arith.index_cast %c1_i32 : i32 to index
    %c1_84 = arith.constant 1 : index
    %c0_85 = arith.constant 0 : index
    %c0_86 = arith.constant 0 : index
    %119 = vector.load %arg3[%118, %c1_84, %c0_85, %c0_86] : memref<2x5x8x128xf32, #tpu.memory_space<vmem>>, vector<1x1x8x128xf32>
    %120 = vector.shape_cast %119 : vector<1x1x8x128xf32> to vector<8x128xf32>
    %121 = arith.negf %117 : vector<8x128xf32>
    %122 = math.exp %121 : vector<8x128xf32>
    %cst_87 = arith.constant 1.000000e+00 : f32
    %123 = vector.broadcast %cst_87 : f32 to vector<8x128xf32>
    %124 = arith.addf %123, %122 : vector<8x128xf32>
    %125 = arith.divf %123, %124 : vector<8x128xf32>
    %126 = arith.subf %125, %120 : vector<8x128xf32>
    %127 = arith.mulf %126, %126 : vector<8x128xf32>
    %128 = arith.index_cast %c1_i32 : i32 to index
    %c2_88 = arith.constant 2 : index
    %c0_89 = arith.constant 0 : index
    %c0_90 = arith.constant 0 : index
    %129 = vector.load %arg2[%128, %c2_88, %c0_89, %c0_90] : memref<2x5x8x128xf32, #tpu.memory_space<vmem>>, vector<1x1x8x128xf32>
    %130 = vector.shape_cast %129 : vector<1x1x8x128xf32> to vector<8x128xf32>
    %131 = arith.index_cast %c1_i32 : i32 to index
    %c2_91 = arith.constant 2 : index
    %c0_92 = arith.constant 0 : index
    %c0_93 = arith.constant 0 : index
    %132 = vector.load %arg3[%131, %c2_91, %c0_92, %c0_93] : memref<2x5x8x128xf32, #tpu.memory_space<vmem>>, vector<1x1x8x128xf32>
    %133 = vector.shape_cast %132 : vector<1x1x8x128xf32> to vector<8x128xf32>
    %134 = arith.negf %130 : vector<8x128xf32>
    %135 = math.exp %134 : vector<8x128xf32>
    %cst_94 = arith.constant 1.000000e+00 : f32
    %136 = vector.broadcast %cst_94 : f32 to vector<8x128xf32>
    %137 = arith.addf %136, %135 : vector<8x128xf32>
    %138 = arith.divf %136, %137 : vector<8x128xf32>
    %139 = arith.subf %138, %133 : vector<8x128xf32>
    %140 = arith.mulf %139, %139 : vector<8x128xf32>
    %141 = arith.addf %127, %140 : vector<8x128xf32>
    %142 = arith.index_cast %c1_i32 : i32 to index
    %c3_95 = arith.constant 3 : index
    %c0_96 = arith.constant 0 : index
    %c0_97 = arith.constant 0 : index
    %143 = vector.load %arg2[%142, %c3_95, %c0_96, %c0_97] : memref<2x5x8x128xf32, #tpu.memory_space<vmem>>, vector<1x1x8x128xf32>
    %144 = vector.shape_cast %143 : vector<1x1x8x128xf32> to vector<8x128xf32>
    %145 = arith.index_cast %c1_i32 : i32 to index
    %c3_98 = arith.constant 3 : index
    %c0_99 = arith.constant 0 : index
    %c0_100 = arith.constant 0 : index
    %146 = vector.load %arg3[%145, %c3_98, %c0_99, %c0_100] : memref<2x5x8x128xf32, #tpu.memory_space<vmem>>, vector<1x1x8x128xf32>
    %147 = vector.shape_cast %146 : vector<1x1x8x128xf32> to vector<8x128xf32>
    %148 = arith.subf %144, %147 : vector<8x128xf32>
    %149 = arith.mulf %148, %148 : vector<8x128xf32>
    %150 = arith.addf %141, %149 : vector<8x128xf32>
    %151 = arith.index_cast %c1_i32 : i32 to index
    %c4_101 = arith.constant 4 : index
    %c0_102 = arith.constant 0 : index
    %c0_103 = arith.constant 0 : index
    %152 = vector.load %arg2[%151, %c4_101, %c0_102, %c0_103] : memref<2x5x8x128xf32, #tpu.memory_space<vmem>>, vector<1x1x8x128xf32>
    %153 = vector.shape_cast %152 : vector<1x1x8x128xf32> to vector<8x128xf32>
    %154 = arith.index_cast %c1_i32 : i32 to index
    %c4_104 = arith.constant 4 : index
    %c0_105 = arith.constant 0 : index
    %c0_106 = arith.constant 0 : index
    %155 = vector.load %arg3[%154, %c4_104, %c0_105, %c0_106] : memref<2x5x8x128xf32, #tpu.memory_space<vmem>>, vector<1x1x8x128xf32>
    %156 = vector.shape_cast %155 : vector<1x1x8x128xf32> to vector<8x128xf32>
    %157 = arith.subf %153, %156 : vector<8x128xf32>
    %158 = arith.mulf %157, %157 : vector<8x128xf32>
    %159 = arith.addf %150, %158 : vector<8x128xf32>
    %c0_107 = arith.constant 0 : index
    %c2_108 = arith.constant 2 : index
    %c0_109 = arith.constant 0 : index
    %c0_110 = arith.constant 0 : index
    %160 = vector.load %arg4[%c0_107, %c2_108, %c0_109, %c0_110] : memref<1x3x8x128xf32, #tpu.memory_space<vmem>>, vector<1x1x8x128xf32>
    %161 = vector.shape_cast %160 : vector<1x1x8x128xf32> to vector<8x128xf32>
    %162 = arith.mulf %95, %159 : vector<8x128xf32>
    %163 = vector.shape_cast %162 : vector<8x128xf32> to vector<1x8x128xf32>
    %cst_111 = arith.constant dense<0.000000e+00> : vector<8x128xf32>
    %164 = vector.multi_reduction <add>, %163, %cst_111 [0] : vector<1x8x128xf32> to vector<8x128xf32>
    %165 = arith.addf %161, %164 : vector<8x128xf32>
    %c0_112 = arith.constant 0 : index
    %c2_113 = arith.constant 2 : index
    %c0_114 = arith.constant 0 : index
    %c0_115 = arith.constant 0 : index
    %166 = vector.load %arg4[%c0_112, %c2_113, %c0_114, %c0_115] : memref<1x3x8x128xf32, #tpu.memory_space<vmem>>, vector<1x1x8x128xf32>
    %167 = vector.shape_cast %166 : vector<1x1x8x128xf32> to vector<8x128xf32>
    %168 = vector.shape_cast %165 : vector<8x128xf32> to vector<1x1x8x128xf32>
    tpu.vector_store %arg4[%c0_112, %c2_113, %c0_114, %c0_115], %168 {strides = array<i32>} : memref<1x3x8x128xf32, #tpu.memory_space<vmem>>, vector<1x1x8x128xf32>,
    %c2_i32 = arith.constant 2 : i32
    return
  }
  func.func @transform_0(%arg0: i32, %arg1: i32) -> (i32, i32, i32, i32) {
    %c1_i32 = arith.constant 1 : i32
    %0 = arith.muli %arg0, %c1_i32 : i32
    %1 = arith.addi %0, %arg1 : i32
    %c0_i32 = arith.constant 0 : i32
    %c0_i32_0 = arith.constant 0 : i32
    %c0_i32_1 = arith.constant 0 : i32
    %c0_i32_2 = arith.constant 0 : i32
    return %c0_i32, %c0_i32_0, %1, %c0_i32_1 : i32, i32, i32, i32
  }
  func.func @transform_1(%arg0: i32, %arg1: i32) -> (i32, i32, i32, i32) {
    %c1_i32 = arith.constant 1 : i32
    %0 = arith.muli %arg0, %c1_i32 : i32
    %1 = arith.addi %0, %arg1 : i32
    %c0_i32 = arith.constant 0 : i32
    %c0_i32_0 = arith.constant 0 : i32
    %c0_i32_1 = arith.constant 0 : i32
    %c0_i32_2 = arith.constant 0 : i32
    return %c0_i32, %c0_i32_0, %1, %c0_i32_1 : i32, i32, i32, i32
  }
  func.func @transform_2(%arg0: i32, %arg1: i32) -> (i32, i32, i32, i32) {
    %c0_i32 = arith.constant 0 : i32
    %c0_i32_0 = arith.constant 0 : i32
    %c0_i32_1 = arith.constant 0 : i32
    %c0_i32_2 = arith.constant 0 : i32
    return %arg0, %c0_i32, %c0_i32_0, %c0_i32_1 : i32, i32, i32, i32
  }
}

</mosaic_0001>

<llo_original>
// kernel: _bibnet_loss_device.1
$region0: #{_bibnet_loss_device.1}
  #allocation0 [shape = 'u32[]', space=smem, size = 0x4, offset = 0x4, fixed_abs, tag = 'smem constant byte address 0x4 - core index']
  #allocation1 [shape = 'u32[144,128]{1,0:T(1,128)}', space=vmem, size = 0x12000, scoped, tag = 'internal scratch']
  %s0 = inlined_call_operand.vmem [shape: f32[2,5,16,128], index: 0, kind: input, shape index: {}]
  %s1 = inlined_call_operand.vmem [shape: f32[2,5,16,128], index: 1, kind: input, shape index: {}]
  %s2 = inlined_call_operand.vmem [shape: f32[2,3,8,128], index: 2, kind: output, shape index: {}]
  %s3 = sld [smem:[#allocation0]]
  $region121: #{_bibnet_loss_device.1} parent=0
    _
  %s5 = ssub.s32 1, %s3
  %s6 = scalar_select 0, %s5, %s3
  $region1: #{_bibnet_loss_device.1} parent=0
    #allocation2 [shape = 'u8[81920]{0}', space=vmem, size = 0x14000, scoped, tag = 'input window, operand 0']
    #allocation3 [shape = 'u8[81920]{0}', space=vmem, size = 0x14000, scoped, tag = 'input window, operand 1']
    loop: start=0, step=1, limit=4
    $region2: #{_bibnet_loss_device.1} parent=1 // loop_pre_header
      _
    $region3: #{_bibnet_loss_device.1} parent=1 // loop_header
      %s8 = sphi 0, %s12
      %p9 = scmp.ge.s32.totalorder %s8, 4
      %s15 = sphi 0, %s27
      %s16 = sphi 0, %s23
      %s17 = sphi 0, %s15
      %s18 = sphi 0, %s16
      %s19 = sphi 0, %s17
      %s20 = sphi 0, %s18
      %s32 = sphi 0, %s34
      %s35 = sphi 0, %s32
      %s36 = sphi 0, %s35
      %s52 = sphi 0, %s36
      %s60 = sphi 0, %s62
      %s63 = sphi 0, %s60
      %s64 = sphi 0, %s63
      %s80 = sphi 0, %s64
      %s86 = sphi 0, %s88
      %s89 = sphi 0, %s86
      %s90 = sphi 0, %s89
      %s106 = sphi 0, %s90
    $region4: #{_bibnet_loss_device.1} parent=1 // loop_header_branch
      %11 = sbr.rel (%p9) target = $region8
    $region5: #{_bibnet_loss_device.1} parent=1 // loop_body
      %s13 = ssub.s32 %s8, 1
      %s14 = ssub.s32 %s8, 2
      %s21 = sadd.s32 1, %s16
      %p22 = scmp.ge.s32.totalorder %s21, 1
      %s23 = scalar_select %p22, 0, %s21
      %s24 = sadd.s32 1, %s15
      %s25 = scalar_select %p22, %s24, %s15
      %p26 = scmp.ge.s32.totalorder %s25, 2
      %s27 = scalar_select %p26, 0, %s25
      %s28 = sadd.s32 %s15, %s16
      %s29 = sadd.s32 %s27, %s23
      %s30 = ssub.s32 %s28, %s29
      %p31 = scmp.eq.s32.totalorder %s30, 0
      %s33 = sadd.s32 %s32, 1
      %s34 = scalar_select %p31, %s32, %s33
      %p37 = pneg %p31
      %p38 = scmp.eq.s32.totalorder %s8, 1
      %p39 = por %p37, %p38
      %p40 = scmp.ne.s32.totalorder %s32, %s35
      %p41 = scmp.eq.s32.totalorder %s8, 0
      %p42 = por %p40, %p41
      %p43 = scmp.ne.s32.totalorder %s32, %s35
      %p44 = scmp.eq.s32.totalorder %s13, 1
      %p45 = por %p43, %p44
      %p46 = scmp.ne.s32.totalorder %s35, %s36
      %p47 = scmp.eq.s32.totalorder %s13, 0
      %p48 = por %p46, %p47
      %p49 = scmp.ne.s32.totalorder %s35, %s36
      %p50 = scmp.eq.s32.totalorder %s14, 1
      %p51 = por %p49, %p50
      %p53 = scmp.ne.s32.totalorder %s36, %s52
      %p54 = scmp.eq.s32.totalorder %s14, 0
      %p55 = por %p53, %p54
      %s56 = sadd.s32 %s15, %s16
      %s57 = sadd.s32 %s27, %s23
      %s58 = ssub.s32 %s56, %s57
      %p59 = scmp.eq.s32.totalorder %s58, 0
      %s61 = sadd.s32 %s60, 1
      %s62 = scalar_select %p59, %s60, %s61
      %p65 = pneg %p59
      %p66 = scmp.eq.s32.totalorder %s8, 1
      %p67 = por %p65, %p66
      %p68 = scmp.ne.s32.totalorder %s60, %s63
      %p69 = scmp.eq.s32.totalorder %s8, 0
      %p70 = por %p68, %p69
      %p71 = scmp.ne.s32.totalorder %s60, %s63
      %p72 = scmp.eq.s32.totalorder %s13, 1
      %p73 = por %p71, %p72
      %p74 = scmp.ne.s32.totalorder %s63, %s64
      %p75 = scmp.eq.s32.totalorder %s13, 0
      %p76 = por %p74, %p75
      %p77 = scmp.ne.s32.totalorder %s63, %s64
      %p78 = scmp.eq.s32.totalorder %s14, 1
      %p79 = por %p77, %p78
      %p81 = scmp.ne.s32.totalorder %s64, %s80
      %p82 = scmp.eq.s32.totalorder %s14, 0
      %p83 = por %p81, %p82
      %s84 = ssub.s32 %s15, %s27
      %p85 = scmp.eq.s32.totalorder %s84, 0
      %s87 = sadd.s32 %s86, 1
      %s88 = scalar_select %p85, %s86, %s87
      %p91 = pneg %p85
      %p92 = scmp.eq.s32.totalorder %s8, 1
      %p93 = por %p91, %p92
      %p94 = scmp.ne.s32.totalorder %s86, %s89
      %p95 = scmp.eq.s32.totalorder %s8, 0
      %p96 = por %p94, %p95
      %p97 = scmp.ne.s32.totalorder %s86, %s89
      %p98 = scmp.eq.s32.totalorder %s13, 1
      %p99 = por %p97, %p98
      %p100 = scmp.ne.s32.totalorder %s89, %s90
      %p101 = scmp.eq.s32.totalorder %s13, 0
      %p102 = por %p100, %p101
      %p103 = scmp.ne.s32.totalorder %s89, %s90
      %p104 = scmp.eq.s32.totalorder %s14, 1
      %p105 = por %p103, %p104
      %p107 = scmp.ne.s32.totalorder %s90, %s106
      %p108 = scmp.eq.s32.totalorder %s14, 0
      %p109 = por %p107, %p108
      %p110 = scmp.le.s32.totalorder 1, %s8
      %p111 = scmp.lt.s32.totalorder %s8, 3
      %p112 = pnand %p110, %p111
      %p113 = pneg %p112
      // Predicated region
      $region9: #{_bibnet_loss_device.1} parent=5 // pred_check
        _
      $region10: #{_bibnet_loss_device.1} parent=5 // pred_check_branch
        %115 = sbr.rel (%p112) target = $region12
      $region11: #{_bibnet_loss_device.1} parent=5 // pred_region
        %s116 = ssub.s32 %s8, 1
      $region12: #{_bibnet_loss_device.1} parent=5 // pred_fallthru
        _
      %p117 = scmp.lt.s32.totalorder %s8, 2
      // Predicated region
      $region13: #{_bibnet_loss_device.1} parent=5 // pred_check
        %p118 = pneg %p117
      $region14: #{_bibnet_loss_device.1} parent=5 // pred_check_branch
        %120 = sbr.rel (%p118) target = $region16
      $region15: #{_bibnet_loss_device.1} parent=5 // pred_region
        // Predicated region
        $region17: #{_bibnet_loss_device.1} parent=15 // pred_check
          %p121 = pneg %p42
        $region18: #{_bibnet_loss_device.1} parent=15 // pred_check_branch
          %123 = sbr.rel (%p121) target = $region20
        $region19: #{_bibnet_loss_device.1} parent=15 // pred_region
          %s124 = sand.u32 %s32, 1
          %s125 = sand.u32 %s32, 1
          %s126 = smul.addr %s125, 80
          %s127 = scalar_lea.vmem [#allocation2], %s126
          %s128 = sadd.s32 %s15, %s16
          %s129 = smul.addr %s128, 8
          %s130 = scalar_lea.vmem %s0, %s129
          // Predicated region
          $region21: #{_bibnet_loss_device.1} parent=19 // pred_check
            _
          $region22: #{_bibnet_loss_device.1} parent=19 // pred_check_branch
            %132 = sbr.rel (0) target = $region24
          $region23: #{_bibnet_loss_device.1} parent=19 // pred_region
            // Predicated region
            $region25: #{_bibnet_loss_device.1} parent=23 // pred_check
              _
            $region26: #{_bibnet_loss_device.1} parent=23 // pred_check_branch
              %134 = sbr.rel (0) target = $region28
            $region27: #{_bibnet_loss_device.1} parent=23 // pred_region
              // Predicated region
              $region40: #{_bibnet_loss_device.1} parent=27 // pred_check
                _
              $region41: #{_bibnet_loss_device.1} parent=27 // pred_check_branch
                %167 = sbr.rel (0) target = $region43
              $region42: #{_bibnet_loss_device.1} parent=27 // pred_region
                loop: start=0, step=1, limit=1
                $region44: #{_bibnet_loss_device.1} parent=42 // loop_pre_header
                  _
                $region45: #{_bibnet_loss_device.1} parent=42 // loop_header
                  %s169 = sphi 0, %s173
                  %p170 = scmp.ge.s32.totalorder %s169, 1
                  %s174 = sphi %s130, %s130
                  %s175 = sphi %s127, %s127
                $region46: #{_bibnet_loss_device.1} parent=42 // loop_header_branch
                  %172 = sbr.rel (%p170) target = $region50
                $region47: #{_bibnet_loss_device.1} parent=42 // loop_body
                  %v176 = vld [vmem:[%s174] sm:$0xff]
                  %177 = vst [vmem:[%s175] sm:$0xff] %v176
                  %v178 = vld [vmem:[%s174 + $0x10] sm:$0xff]
                  %179 = vst [vmem:[%s175 + $0x8] sm:$0xff] %v178
                  %v180 = vld [vmem:[%s174 + $0x20] sm:$0xff]
                  %181 = vst [vmem:[%s175 + $0x10] sm:$0xff] %v180
                  %v182 = vld [vmem:[%s174 + $0x30] sm:$0xff]
                  %183 = vst [vmem:[%s175 + $0x18] sm:$0xff] %v182
                  %v184 = vld [vmem:[%s174 + $0x40] sm:$0xff]
                  %185 = vst [vmem:[%s175 + $0x20] sm:$0xff] %v184
                  %v186 = vld [vmem:[%s174 + $0x50] sm:$0xff]
                  %187 = vst [vmem:[%s175 + $0x28] sm:$0xff] %v186
                  %v188 = vld [vmem:[%s174 + $0x60] sm:$0xff]
                  %189 = vst [vmem:[%s175 + $0x30] sm:$0xff] %v188
                  %v190 = vld [vmem:[%s174 + $0x70] sm:$0xff]
                  %191 = vst [vmem:[%s175 + $0x38] sm:$0xff] %v190
                  %v192 = vld [vmem:[%s174 + $0x80] sm:$0xff]
                  %193 = vst [vmem:[%s175 + $0x40] sm:$0xff] %v192
                  %v194 = vld [vmem:[%s174 + $0x90] sm:$0xff]
                  %195 = vst [vmem:[%s175 + $0x48] sm:$0xff] %v194
                $region48: #{_bibnet_loss_device.1} parent=42 // loop_footer
                  %s173 = sadd.s32 1, %s169
                $region49: #{_bibnet_loss_device.1} parent=42 // loop_footer_branch
                  %168 = sbr.rel target = $region45
                $region50: #{_bibnet_loss_device.1} parent=42 // loop_exit
                  _
              $region43: #{_bibnet_loss_device.1} parent=27 // pred_fallthru
                _
              // Predicated region
              $region51: #{_bibnet_loss_device.1} parent=27 // pred_check
                _
              $region52: #{_bibnet_loss_device.1} parent=27 // pred_check_branch
                %197 = sbr.rel target = $region54
              $region53: #{_bibnet_loss_device.1} parent=27 // pred_region
                _
              $region54: #{_bibnet_loss_device.1} parent=27 // pred_fallthru
                _
            $region28: #{_bibnet_loss_device.1} parent=23 // pred_fallthru
              _
            // Predicated region
            $region29: #{_bibnet_loss_device.1} parent=23 // pred_check
              _
            $region30: #{_bibnet_loss_device.1} parent=23 // pred_check_branch
              %136 = sbr.rel target = $region32
            $region31: #{_bibnet_loss_device.1} parent=23 // pred_region
              loop: start=0, step=1, limit=1
              $region33: #{_bibnet_loss_device.1} parent=31 // loop_pre_header
                _
              $region34: #{_bibnet_loss_device.1} parent=31 // loop_header
                %s139 = sphi 0, %s143
                %p140 = scmp.ge.s32.totalorder %s139, 1
                %s144 = sphi %s130, %s130
                %s145 = sphi %s127, %s127
              $region35: #{_bibnet_loss_device.1} parent=31 // loop_header_branch
                %142 = sbr.rel (%p140) target = $region39
              $region36: #{_bibnet_loss_device.1} parent=31 // loop_body
                %v146 = vld [vmem:[%s144] sm:$0xff]
                %147 = vst [vmem:[%s145] sm:$0xff] %v146
                %v148 = vld [vmem:[%s144 + $0x10] sm:$0xff]
                %149 = vst [vmem:[%s145 + $0x8] sm:$0xff] %v148
                %v150 = vld [vmem:[%s144 + $0x20] sm:$0xff]
                %151 = vst [vmem:[%s145 + $0x10] sm:$0xff] %v150
                %v152 = vld [vmem:[%s144 + $0x30] sm:$0xff]
                %153 = vst [vmem:[%s145 + $0x18] sm:$0xff] %v152
                %v154 = vld [vmem:[%s144 + $0x40] sm:$0xff]
                %155 = vst [vmem:[%s145 + $0x20] sm:$0xff] %v154
                %v156 = vld [vmem:[%s144 + $0x50] sm:$0xff]
                %157 = vst [vmem:[%s145 + $0x28] sm:$0xff] %v156
                %v158 = vld [vmem:[%s144 + $0x60] sm:$0xff]
                %159 = vst [vmem:[%s145 + $0x30] sm:$0xff] %v158
                %v160 = vld [vmem:[%s144 + $0x70] sm:$0xff]
                %161 = vst [vmem:[%s145 + $0x38] sm:$0xff] %v160
                %v162 = vld [vmem:[%s144 + $0x80] sm:$0xff]
                %163 = vst [vmem:[%s145 + $0x40] sm:$0xff] %v162
                %v164 = vld [vmem:[%s144 + $0x90] sm:$0xff]
                %165 = vst [vmem:[%s145 + $0x48] sm:$0xff] %v164
              $region37: #{_bibnet_loss_device.1} parent=31 // loop_footer
                %s143 = sadd.s32 1, %s139
              $region38: #{_bibnet_loss_device.1} parent=31 // loop_footer_branch
                %138 = sbr.rel target = $region34
              $region39: #{_bibnet_loss_device.1} parent=31 // loop_exit
                _
            $region32: #{_bibnet_loss_device.1} parent=23 // pred_fallthru
              _
          $region24: #{_bibnet_loss_device.1} parent=19 // pred_fallthru
            _
          %198 = vnop
        $region20: #{_bibnet_loss_device.1} parent=15 // pred_fallthru
          _
        // Predicated region
        $region55: #{_bibnet_loss_device.1} parent=15 // pred_check
          %p199 = pneg %p70
        $region56: #{_bibnet_loss_device.1} parent=15 // pred_check_branch
          %201 = sbr.rel (%p199) target = $region58
        $region57: #{_bibnet_loss_device.1} parent=15 // pred_region
          %s202 = sand.u32 %s60, 1
          %s203 = sand.u32 %s60, 1
          %s204 = smul.addr %s203, 80
          %s205 = scalar_lea.vmem [#allocation3], %s204
          %s206 = sadd.s32 %s15, %s16
          %s207 = smul.addr %s206, 8
          %s208 = scalar_lea.vmem %s1, %s207
          // Predicated region
          $region59: #{_bibnet_loss_device.1} parent=57 // pred_check
            _
          $region60: #{_bibnet_loss_device.1} parent=57 // pred_check_branch
            %210 = sbr.rel (0) target = $region62
          $region61: #{_bibnet_loss_device.1} parent=57 // pred_region
            // Predicated region
            $region63: #{_bibnet_loss_device.1} parent=61 // pred_check
              _
            $region64: #{_bibnet_loss_device.1} parent=61 // pred_check_branch
              %212 = sbr.rel (0) target = $region66
            $region65: #{_bibnet_loss_device.1} parent=61 // pred_region
              // Predicated region
              $region78: #{_bibnet_loss_device.1} parent=65 // pred_check
                _
              $region79: #{_bibnet_loss_device.1} parent=65 // pred_check_branch
                %245 = sbr.rel (0) target = $region81
              $region80: #{_bibnet_loss_device.1} parent=65 // pred_region
                loop: start=0, step=1, limit=1
                $region82: #{_bibnet_loss_device.1} parent=80 // loop_pre_header
                  _
                $region83: #{_bibnet_loss_device.1} parent=80 // loop_header
                  %s247 = sphi 0, %s251
                  %p248 = scmp.ge.s32.totalorder %s247, 1
                  %s252 = sphi %s208, %s208
                  %s253 = sphi %s205, %s205
                $region84: #{_bibnet_loss_device.1} parent=80 // loop_header_branch
                  %250 = sbr.rel (%p248) target = $region88
                $region85: #{_bibnet_loss_device.1} parent=80 // loop_body
                  %v254 = vld [vmem:[%s252] sm:$0xff]
                  %255 = vst [vmem:[%s253] sm:$0xff] %v254
                  %v256 = vld [vmem:[%s252 + $0x10] sm:$0xff]
                  %257 = vst [vmem:[%s253 + $0x8] sm:$0xff] %v256
                  %v258 = vld [vmem:[%s252 + $0x20] sm:$0xff]
                  %259 = vst [vmem:[%s253 + $0x10] sm:$0xff] %v258
                  %v260 = vld [vmem:[%s252 + $0x30] sm:$0xff]
                  %261 = vst [vmem:[%s253 + $0x18] sm:$0xff] %v260
                  %v262 = vld [vmem:[%s252 + $0x40] sm:$0xff]
                  %263 = vst [vmem:[%s253 + $0x20] sm:$0xff] %v262
                  %v264 = vld [vmem:[%s252 + $0x50] sm:$0xff]
                  %265 = vst [vmem:[%s253 + $0x28] sm:$0xff] %v264
                  %v266 = vld [vmem:[%s252 + $0x60] sm:$0xff]
                  %267 = vst [vmem:[%s253 + $0x30] sm:$0xff] %v266
                  %v268 = vld [vmem:[%s252 + $0x70] sm:$0xff]
                  %269 = vst [vmem:[%s253 + $0x38] sm:$0xff] %v268
                  %v270 = vld [vmem:[%s252 + $0x80] sm:$0xff]
                  %271 = vst [vmem:[%s253 + $0x40] sm:$0xff] %v270
                  %v272 = vld [vmem:[%s252 + $0x90] sm:$0xff]
                  %273 = vst [vmem:[%s253 + $0x48] sm:$0xff] %v272
                $region86: #{_bibnet_loss_device.1} parent=80 // loop_footer
                  %s251 = sadd.s32 1, %s247
                $region87: #{_bibnet_loss_device.1} parent=80 // loop_footer_branch
                  %246 = sbr.rel target = $region83
                $region88: #{_bibnet_loss_device.1} parent=80 // loop_exit
                  _
              $region81: #{_bibnet_loss_device.1} parent=65 // pred_fallthru
                _
              // Predicated region
              $region89: #{_bibnet_loss_device.1} parent=65 // pred_check
                _
              $region90: #{_bibnet_loss_device.1} parent=65 // pred_check_branch
                %275 = sbr.rel target = $region92
              $region91: #{_bibnet_loss_device.1} parent=65 // pred_region
                _
              $region92: #{_bibnet_loss_device.1} parent=65 // pred_fallthru
                _
            $region66: #{_bibnet_loss_device.1} parent=61 // pred_fallthru
              _
            // Predicated region
            $region67: #{_bibnet_loss_device.1} parent=61 // pred_check
              _
            $region68: #{_bibnet_loss_device.1} parent=61 // pred_check_branch
              %214 = sbr.rel target = $region70
            $region69: #{_bibnet_loss_device.1} parent=61 // pred_region
              loop: start=0, step=1, limit=1
              $region71: #{_bibnet_loss_device.1} parent=69 // loop_pre_header
                _
              $region72: #{_bibnet_loss_device.1} parent=69 // loop_header
                %s217 = sphi 0, %s221
                %p218 = scmp.ge.s32.totalorder %s217, 1
                %s222 = sphi %s208, %s208
                %s223 = sphi %s205, %s205
              $region73: #{_bibnet_loss_device.1} parent=69 // loop_header_branch
                %220 = sbr.rel (%p218) target = $region77
              $region74: #{_bibnet_loss_device.1} parent=69 // loop_body
                %v224 = vld [vmem:[%s222] sm:$0xff]
                %225 = vst [vmem:[%s223] sm:$0xff] %v224
                %v226 = vld [vmem:[%s222 + $0x10] sm:$0xff]
                %227 = vst [vmem:[%s223 + $0x8] sm:$0xff] %v226
                %v228 = vld [vmem:[%s222 + $0x20] sm:$0xff]
                %229 = vst [vmem:[%s223 + $0x10] sm:$0xff] %v228
                %v230 = vld [vmem:[%s222 + $0x30] sm:$0xff]
                %231 = vst [vmem:[%s223 + $0x18] sm:$0xff] %v230
                %v232 = vld [vmem:[%s222 + $0x40] sm:$0xff]
                %233 = vst [vmem:[%s223 + $0x20] sm:$0xff] %v232
                %v234 = vld [vmem:[%s222 + $0x50] sm:$0xff]
                %235 = vst [vmem:[%s223 + $0x28] sm:$0xff] %v234
                %v236 = vld [vmem:[%s222 + $0x60] sm:$0xff]
                %237 = vst [vmem:[%s223 + $0x30] sm:$0xff] %v236
                %v238 = vld [vmem:[%s222 + $0x70] sm:$0xff]
                %239 = vst [vmem:[%s223 + $0x38] sm:$0xff] %v238
                %v240 = vld [vmem:[%s222 + $0x80] sm:$0xff]
                %241 = vst [vmem:[%s223 + $0x40] sm:$0xff] %v240
                %v242 = vld [vmem:[%s222 + $0x90] sm:$0xff]
                %243 = vst [vmem:[%s223 + $0x48] sm:$0xff] %v242
              $region75: #{_bibnet_loss_device.1} parent=69 // loop_footer
                %s221 = sadd.s32 1, %s217
              $region76: #{_bibnet_loss_device.1} parent=69 // loop_footer_branch
                %216 = sbr.rel target = $region72
              $region77: #{_bibnet_loss_device.1} parent=69 // loop_exit
                _
            $region70: #{_bibnet_loss_device.1} parent=61 // pred_fallthru
              _
          $region62: #{_bibnet_loss_device.1} parent=57 // pred_fallthru
            _
          %276 = vnop
        $region58: #{_bibnet_loss_device.1} parent=15 // pred_fallthru
          _
      $region16: #{_bibnet_loss_device.1} parent=5 // pred_fallthru
        _
      %p277 = scmp.le.s32.totalorder 1, %s8
      %p278 = scmp.lt.s32.totalorder %s8, 3
      %p279 = pnand %p277, %p278
      %p280 = pneg %p279
      // Predicated region
      $region93: #{_bibnet_loss_device.1} parent=5 // pred_check
        _
      $region94: #{_bibnet_loss_device.1} parent=5 // pred_check_branch
        %282 = sbr.rel (%p279) target = $region96
      $region95: #{_bibnet_loss_device.1} parent=5 // pred_region
        %s283 = ssub.s32 %s8, 1
        %s284 = sand.u32 %s35, 1
        %s285 = sand.u32 %s35, 1
        %s286 = smul.addr %s285, 80
        %s287 = scalar_lea.vmem [#allocation2], %s286
        // Predicated region
        $region97: #{_bibnet_loss_device.1} parent=95 // pred_check
          %p288 = pneg %p48
        $region98: #{_bibnet_loss_device.1} parent=95 // pred_check_branch
          %290 = sbr.rel (%p288) target = $region100
        $region99: #{_bibnet_loss_device.1} parent=95 // pred_region
          _
        $region100: #{_bibnet_loss_device.1} parent=95 // pred_fallthru
          _
        %s291 = sand.u32 %s63, 1
        %s292 = sand.u32 %s63, 1
        %s293 = smul.addr %s292, 80
        %s294 = scalar_lea.vmem [#allocation3], %s293
        // Predicated region
        $region101: #{_bibnet_loss_device.1} parent=95 // pred_check
          %p295 = pneg %p76
        $region102: #{_bibnet_loss_device.1} parent=95 // pred_check_branch
          %297 = sbr.rel (%p295) target = $region104
        $region103: #{_bibnet_loss_device.1} parent=95 // pred_region
          _
        $region104: #{_bibnet_loss_device.1} parent=95 // pred_fallthru
          _
        %s298 = sand.u32 %s35, 1
        %s299 = sand.u32 %s35, 1
        %s300 = smul.addr %s299, 80
        %s301 = scalar_lea.vmem [#allocation2], %s300
        %p302 = pneg %p48
        %p303 = pneg %p45
        %s304 = sand.u32 %s63, 1
        %s305 = sand.u32 %s63, 1
        %s306 = smul.addr %s305, 80
        %s307 = scalar_lea.vmem [#allocation3], %s306
        %p308 = pneg %p76
        %p309 = pneg %p73
        %p310 = pneg %p102
        %p311 = pneg %p99
        %p312 = scmp.lt.s32.totalorder %s17, 1
        %s313 = scalar_select %p312, %s17, 1
        %s314 = smul.addr %s313, 3
        %s315 = smul.addr %s314, 8
        %s316 = scalar_lea.vmem %s2, %s315
        %s317 = sadd.s32 %s17, %s18
        %s318 = sadd.s32 %s17, %s18
        %p319 = scmp.lt.s32.totalorder %s17, 1
        %s320 = scalar_select %p319, %s17, 1
        %s321 = smul.addr %s320, 3
        %s322 = smul.addr %s321, 8
        %s323 = scalar_lea.vmem %s2, %s322
        %p324 = scmp.eq.s32.totalorder %s18, 0
        // Predicated region
        $region105: #{_bibnet_loss_device.1} parent=95 // pred_check
          %p325 = pneg %p324
        $region106: #{_bibnet_loss_device.1} parent=95 // pred_check_branch
          %327 = sbr.rel (%p325) target = $region108
        $region107: #{_bibnet_loss_device.1} parent=95 // pred_region
          %328 = vst [vmem:[%s323] sm:$0xff] 0.0
          %329 = vst [vmem:[%s323 + $0x8] sm:$0xff] 0.0
          %330 = vst [vmem:[%s323 + $0x10] sm:$0xff] 0.0
        $region108: #{_bibnet_loss_device.1} parent=95 // pred_fallthru
          _
        %v331 = vld [vmem:[%s294] sm:$0xff]
        %v332 = vld [vmem:[%s287] sm:$0xff]
        %vm333 = vcmp.gt.f32.partialorder %v331, 0.5
        %v334 = vsel %vm333, 1, 0
        %v335 = vcvt.s32.f32 %v334
        %v336 = vsub.f32 %v332, %v331
        %v337 = vmul.f32 %v336, %v336
        %v338 = vld [vmem:[%s323] sm:$0xff]
        %v339 = vadd.f32 %v337, 0.0
        %v340 = vadd.f32 %v338, %v339
        %341 = vst [vmem:[%s323] sm:$0xff] %v340
        %s342 = scalar_lea.vmem %s323, 8
        %v343 = vld [vmem:[%s342] sm:$0xff]
        %v344 = vmul.f32 %v335, %v337
        %v345 = vadd.f32 %v344, 0.0
        %v346 = vadd.f32 %v343, %v345
        %347 = vst [vmem:[%s342] sm:$0xff] %v346
        %s348 = scalar_lea.vmem %s287, 8 [#allocation2]
        %v349 = vld [vmem:[%s348] sm:$0xff]
        %s350 = scalar_lea.vmem %s294, 8 [#allocation3]
        %v351 = vld [vmem:[%s350] sm:$0xff]
        %v352 = vxor.u32 %v349, 2147483648
        %v353 = vmul.f32 %v352, 1.442695
        %v354 = vpow.pop %v353
        %v355 = vadd.f32 %v354, 1.0
        %v356 = vrcp.pop %v355
        %v357 = vmul.f32 1.0, %v356
        %v358 = vsub.f32 %v357, %v351
        %v359 = vmul.f32 %v358, %v358
        %s360 = scalar_lea.vmem %s287, 16 [#allocation2]
        %v361 = vld [vmem:[%s360] sm:$0xff]
        %s362 = scalar_lea.vmem %s294, 16 [#allocation3]
        %v363 = vld [vmem:[%s362] sm:$0xff]
        %v364 = vxor.u32 %v361, 2147483648
        %v365 = vmul.f32 %v364, 1.442695
        %v366 = vpow.pop %v365
        %v367 = vadd.f32 %v366, 1.0
        %v368 = vrcp.pop %v367
        %v369 = vmul.f32 1.0, %v368
        %v370 = vsub.f32 %v369, %v363
        %v371 = vmul.f32 %v370, %v370
        %v372 = vadd.f32 %v359, %v371
        %s373 = scalar_lea.vmem %s287, 24 [#allocation2]
        %v374 = vld [vmem:[%s373] sm:$0xff]
        %s375 = scalar_lea.vmem %s294, 24 [#allocation3]
        %v376 = vld [vmem:[%s375] sm:$0xff]
        %v377 = vsub.f32 %v374, %v376
        %v378 = vmul.f32 %v377, %v377
        %v379 = vadd.f32 %v372, %v378
        %s380 = scalar_lea.vmem %s287, 32 [#allocation2]
        %v381 = vld [vmem:[%s380] sm:$0xff]
        %s382 = scalar_lea.vmem %s294, 32 [#allocation3]
        %v383 = vld [vmem:[%s382] sm:$0xff]
        %v384 = vsub.f32 %v381, %v383
        %v385 = vmul.f32 %v384, %v384
        %v386 = vadd.f32 %v379, %v385
        %s387 = scalar_lea.vmem %s323, 16
        %v388 = vld [vmem:[%s387] sm:$0xff]
        %v389 = vmul.f32 %v335, %v386
        %v390 = vadd.f32 %v389, 0.0
        %v391 = vadd.f32 %v388, %v390
        %392 = vst [vmem:[%s387] sm:$0xff] %v391
        %s393 = scalar_lea.vmem %s294, 40 [#allocation3]
        %v394 = vld [vmem:[%s393] sm:$0xff]
        %s395 = scalar_lea.vmem %s287, 40 [#allocation2]
        %v396 = vld [vmem:[%s395] sm:$0xff]
        %vm397 = vcmp.gt.f32.partialorder %v394, 0.5
        %v398 = vsel %vm397, 1, 0
        %v399 = vcvt.s32.f32 %v398
        %v400 = vsub.f32 %v396, %v394
        %v401 = vmul.f32 %v400, %v400
        %v402 = vld [vmem:[%s323] sm:$0xff]
        %v403 = vadd.f32 %v401, 0.0
        %v404 = vadd.f32 %v402, %v403
        %405 = vst [vmem:[%s323] sm:$0xff] %v404
        %v406 = vld [vmem:[%s342] sm:$0xff]
        %v407 = vmul.f32 %v399, %v401
        %v408 = vadd.f32 %v407, 0.0
        %v409 = vadd.f32 %v406, %v408
        %410 = vst [vmem:[%s342] sm:$0xff] %v409
        %s411 = scalar_lea.vmem %s287, 48 [#allocation2]
        %v412 = vld [vmem:[%s411] sm:$0xff]
        %s413 = scalar_lea.vmem %s294, 48 [#allocation3]
        %v414 = vld [vmem:[%s413] sm:$0xff]
        %v415 = vxor.u32 %v412, 2147483648
        %v416 = vmul.f32 %v415, 1.442695
        %v417 = vpow.pop %v416
        %v418 = vadd.f32 %v417, 1.0
        %v419 = vrcp.pop %v418
        %v420 = vmul.f32 1.0, %v419
        %v421 = vsub.f32 %v420, %v414
        %v422 = vmul.f32 %v421, %v421
        %s423 = scalar_lea.vmem %s287, 56 [#allocation2]
        %v424 = vld [vmem:[%s423] sm:$0xff]
        %s425 = scalar_lea.vmem %s294, 56 [#allocation3]
        %v426 = vld [vmem:[%s425] sm:$0xff]
        %v427 = vxor.u32 %v424, 2147483648
        %v428 = vmul.f32 %v427, 1.442695
        %v429 = vpow.pop %v428
        %v430 = vadd.f32 %v429, 1.0
        %v431 = vrcp.pop %v430
        %v432 = vmul.f32 1.0, %v431
        %v433 = vsub.f32 %v432, %v426
        %v434 = vmul.f32 %v433, %v433
        %v435 = vadd.f32 %v422, %v434
        %s436 = scalar_lea.vmem %s287, 64 [#allocation2]
        %v437 = vld [vmem:[%s436] sm:$0xff]
        %s438 = scalar_lea.vmem %s294, 64 [#allocation3]
        %v439 = vld [vmem:[%s438] sm:$0xff]
        %v440 = vsub.f32 %v437, %v439
        %v441 = vmul.f32 %v440, %v440
        %v442 = vadd.f32 %v435, %v441
        %s443 = scalar_lea.vmem %s287, 72 [#allocation2]
        %v444 = vld [vmem:[%s443] sm:$0xff]
        %s445 = scalar_lea.vmem %s294, 72 [#allocation3]
        %v446 = vld [vmem:[%s445] sm:$0xff]
        %v447 = vsub.f32 %v444, %v446
        %v448 = vmul.f32 %v447, %v447
        %v449 = vadd.f32 %v442, %v448
        %v450 = vld [vmem:[%s387] sm:$0xff]
        %v451 = vmul.f32 %v399, %v449
        %v452 = vadd.f32 %v451, 0.0
        %v453 = vadd.f32 %v450, %v452
        %454 = vst [vmem:[%s387] sm:$0xff] %v453
        %p455 = scmp.lt.s32.totalorder %s17, 1
        %s456 = scalar_select %p455, %s17, 1
        %s457 = smul.addr %s456, 3
        %s458 = smul.addr %s457, 8
        %s459 = scalar_lea.vmem %s2, %s458
        // Predicated region
        $region109: #{_bibnet_loss_device.1} parent=95 // pred_check
          %p460 = pneg %p99
        $region110: #{_bibnet_loss_device.1} parent=95 // pred_check_branch
          %462 = sbr.rel (%p460) target = $region112
        $region111: #{_bibnet_loss_device.1} parent=95 // pred_region
          _
        $region112: #{_bibnet_loss_device.1} parent=95 // pred_fallthru
          _
      $region96: #{_bibnet_loss_device.1} parent=5 // pred_fallthru
        _
      %p463 = scmp.le.s32.totalorder 2, %s8
      // Predicated region
      $region113: #{_bibnet_loss_device.1} parent=5 // pred_check
        %p464 = pneg %p463
      $region114: #{_bibnet_loss_device.1} parent=5 // pred_check_branch
        %466 = sbr.rel (%p464) target = $region116
      $region115: #{_bibnet_loss_device.1} parent=5 // pred_region
        %s467 = ssub.s32 %s8, 2
        // Predicated region
        $region117: #{_bibnet_loss_device.1} parent=115 // pred_check
          %p468 = pneg %p105
        $region118: #{_bibnet_loss_device.1} parent=115 // pred_check_branch
          %470 = sbr.rel (%p468) target = $region120
        $region119: #{_bibnet_loss_device.1} parent=115 // pred_region
          %p471 = scmp.lt.s32.totalorder %s19, 1
          %s472 = scalar_select %p471, %s19, 1
          %s473 = smul.addr %s472, 3
          %s474 = smul.addr %s473, 8
          %s475 = scalar_lea.vmem %s2, %s474
        $region120: #{_bibnet_loss_device.1} parent=115 // pred_fallthru
          _
      $region116: #{_bibnet_loss_device.1} parent=5 // pred_fallthru
        _
    $region6: #{_bibnet_loss_device.1} parent=1 // loop_footer
      %s12 = sadd.s32 1, %s8
    $region7: #{_bibnet_loss_device.1} parent=1 // loop_footer_branch
      %7 = sbr.rel target = $region3
    $region8: #{_bibnet_loss_device.1} parent=1 // loop_exit
      _

</llo_original>
